<compile_context>
chip_gen: v7x
topology: tpu7x:2x2x1
jax: 0.10.0
libtpu: 0.0.40
codegen_flags: <defaults>
</compile_context>

<pallas_src>
import functools

import jax
import jax.numpy as jnp
from jax.experimental import pallas as pl
from jax.experimental.pallas import tpu as pltpu


_NUM_SPLITS_DEFAULT = 2  # leading "parallel" grid axis (dual TC on v7x)


def _dice_loss_kernel(x_ref, t_ref, o_ref, *, n_rows, tile_rows, steps_per_split):
    # x_ref: (tile_rows, C) input dtype (bf16/f32/...)  -- input_flat tile
    # t_ref: (tile_rows, C) target dtype (int8/int32/float) -- raw target tile
    # o_ref: (1, 8, 128) f32 -- this split's resident partial dice-sum block
    c = pl.program_id(0)
    i = pl.program_id(1)

    @pl.when(i == 0)
    def _init():
        o_ref[...] = jnp.zeros_like(o_ref)

    # Upcast in-kernel (inputs arrive in their narrow native dtypes).
    x = x_ref[...].astype(jnp.float32)
    t = t_ref[...]
    if jnp.issubdtype(t.dtype, jnp.floating):
        t = t.astype(jnp.int32)  # torch .long(): truncate toward zero
    t = t.astype(jnp.float32)

    smooth = jnp.float32(1.0)
    inter = jnp.sum(x * t, axis=1, keepdims=True)   # (tile_rows, 1)
    den = jnp.sum(x + t, axis=1, keepdims=True)     # fused input+target row sums
    dice = 2.0 * (inter + smooth) / (den + smooth)  # exact divide (no approx recip)
    # TODO(synk): if the narrow-dtype change ever exposes compute on v7x, move
    # inter/den onto the idle MXU as skinny matmuls against ones((C, 1)).

    # Mask logical rows >= R AFTER the divide: garbage padded rows and clamped
    # duplicate blocks contribute nothing (select discards their NaN/Inf).
    blk = c * steps_per_split + i
    row = blk * tile_rows + jax.lax.broadcasted_iota(jnp.int32, dice.shape, 0)
    dice = jnp.where(row < n_rows, dice, jnp.float32(0.0))

    # Accumulate directly into the resident per-split output block.
    o_ref[...] += jnp.sum(dice)


def _sublane_align(dtype):
    # f32 -> 8, bf16 -> 16, int8/bool -> 32 sublanes.
    return max(8, 32 // jnp.dtype(dtype).itemsize)


def _choose_tile_rows(n_rows, n_cols, x_dtype, t_dtype):
    """Largest sublane-aligned row tile whose double-buffered input blocks plus
    f32 elementwise temporaries fit a conservative ~24 MiB working set
    (safe on v5e/v6e and under v7x's 64 MiB physical VMEM)."""
    c_pad = ((max(n_cols, 1) + 127) // 128) * 128   # lane padding
    x_b = jnp.dtype(x_dtype).itemsize
    t_b = jnp.dtype(t_dtype).itemsize
    per_row = 2 * c_pad * (x_b + t_b) + 3 * c_pad * 4  # 2 bufs x inputs + f32 temps
    budget = 24 * 1024 * 1024
    align = max(_sublane_align(x_dtype), _sublane_align(t_dtype))
    tile = max(align, min(budget // per_row, 16384))
    tile = (tile // align) * align
    if n_rows <= tile:
        return n_rows                                # single full-extent block
    return tile


def dice_loss(inp, target, *, tile_rows=None, use_pallas=None,
              num_splits=_NUM_SPLITS_DEFAULT):
    """Exact reimplementation of DiceLoss.forward.

    inp:    (N, C, H, W) float (bf16/f32), H*W == 1 so the module's broadcast
            is a well-defined elementwise product.
    target: (N, C) int8/int32/bool/float labels (.long() applied in-kernel).
    """
    N, C, H, W = inp.shape
    # Flatten glue (matches view/transpose/view); free for H*W == 1. No dtype
    # widening here -- narrow dtypes go straight into the kernel.
    x = jnp.transpose(inp.reshape(N, C, H * W), (0, 2, 1)).reshape(-1, C)
    t = target.reshape(N, -1)
    assert x.shape == t.shape, (
        "DiceLoss broadcast is only elementwise when H*W == 1 and "
        "target.numel()//N == C"
    )

    R = x.shape[0]
    if use_pallas is None:
        # Module's own constraint means R = N (tens): launch-overhead-bound,
        # plain XLA wins. Kernel pays off for large R.
        use_pallas = R >= 1024
    if not use_pallas:
        return _reference(inp, target)

    if tile_rows is None:
        tile_rows = _choose_tile_rows(R, C, x.dtype, t.dtype)
    total_blocks = pl.cdiv(R, tile_rows)
    num_splits = max(1, min(num_splits, total_blocks))
    steps_per_split = pl.cdiv(total_blocks, num_splits)
    last_block = total_blocks - 1

    def in_map(c, i):
        # Splits may overshoot the block range; clamp to a valid block and let
        # the in-kernel row mask zero the duplicate contribution.
        return (jnp.minimum(c * steps_per_split + i, last_block), 0)

    kernel = functools.partial(
        _dice_loss_kernel, n_rows=R, tile_rows=tile_rows,
        steps_per_split=steps_per_split)

    partials = pl.pallas_call(
        kernel,
        out_shape=jax.ShapeDtypeStruct((num_splits, 8, 128), jnp.float32),
        grid_spec=pltpu.PrefetchScalarGridSpec(
            num_scalar_prefetch=0,
            grid=(num_splits, steps_per_split),
            in_specs=[
                pl.BlockSpec((tile_rows, C), in_map),
                pl.BlockSpec((tile_rows, C), in_map),
            ],
            out_specs=pl.BlockSpec((1, 8, 128), lambda c, i: (c, 0, 0)),
        ),
        compiler_params=pltpu.CompilerParams(
            dimension_semantics=("parallel", "arbitrary"),
            vmem_limit_bytes=48 * 1024 * 1024,   # headroom under v7x 64 MiB
        ),
    )(x, t)
    # Tiny epilogue in XLA: combine per-split partials and normalize.
    return jnp.float32(1.0) - partials[:, 0, 0].sum() / jnp.float32(N)


def _reference(inp, target):
    """Pure-JAX transliteration of the PyTorch forward."""
    N, C, H, W = inp.shape
    x = jnp.transpose(inp.reshape(N, C, H * W), (0, 2, 1)).reshape(-1, C)
    x = x.astype(jnp.float32)
    t = target
    if jnp.issubdtype(t.dtype, jnp.floating):
        t = t.astype(jnp.int32)
    t = t.astype(jnp.float32).reshape(N, -1)
    inter = jnp.sum(x * t, axis=1)
    dice = 2.0 * (inter + 1.0) / (jnp.sum(x, axis=1) + jnp.sum(t, axis=1) + 1.0)
    return 1.0 - jnp.sum(dice) / N


if __name__ == "__main__":
    key = jax.random.PRNGKey(0)
    k1, k2, k3, k4 = jax.random.split(key, 4)

    # Case 1: narrow native dtypes (bf16 input, int8 target), lane-dense C=128,
    # single tile (H = W = 1 required by the module's broadcast).
    N1, C1 = 32, 128
    inp1 = jax.random.uniform(k1, (N1, C1, 1, 1), dtype=jnp.bfloat16)
    tgt1 = (jax.random.uniform(k2, (N1, C1), dtype=jnp.float32) > 0.5).astype(jnp.int8)
    loss1 = dice_loss(inp1, tgt1, use_pallas=True)
    jax.block_until_ready(loss1)
    ref1 = _reference(inp1, tgt1)
    assert jnp.allclose(loss1, ref1, rtol=1e-5, atol=1e-5), (loss1, ref1)

    # Case 2: dual-split grid (parallel axis) with a partial, masked last tile
    # and a clamped overshoot block.
    N2, C2 = 80, 128
    inp2 = jax.random.uniform(k3, (N2, C2, 1, 1), dtype=jnp.bfloat16)
    tgt2 = (jax.random.uniform(k4, (N2, C2), dtype=jnp.float32) > 0.5).astype(jnp.int8)
    loss2 = dice_loss(inp2, tgt2, tile_rows=32, use_pallas=True)
    jax.block_until_ready(loss2)
    ref2 = _reference(inp2, tgt2)
    assert jnp.allclose(loss2, ref2, rtol=1e-5, atol=1e-5), (loss2, ref2)

    print("KERNEL_OK")
</pallas_src>

<mosaic_0001>
module attributes {stable_mosaic.version = 11 : i64} {
  func.func @_dice_loss_kernel(%arg0: i32, %arg1: i32, %arg2: memref<32x128xbf16, #tpu.memory_space<vmem>>, %arg3: memref<32x128xi8, #tpu.memory_space<vmem>>, %arg4: memref<1x8x128xf32, #tpu.memory_space<vmem>>) attributes {dimension_semantics = [#tpu.dimension_semantics<parallel>, #tpu.dimension_semantics<arbitrary>], iteration_bounds = array<i64: 1, 1>, scalar_prefetch = 0 : i64, scratch_operands = 0 : i64, tpu.core_type = #tpu.core_type<tc>, window_params = [{transform_indices = @transform_0, window_bounds = array<i64: 32, 128>}, {transform_indices = @transform_1, window_bounds = array<i64: 32, 128>}, {transform_indices = @transform_2, window_bounds = array<i64: 1, 8, 128>}]} {
    %c0_i32 = arith.constant 0 : i32
    %0 = arith.cmpi eq, %arg1, %c0_i32 : i32
    %1 = arith.extui %0 : i1 to i32
    %c0_i32_0 = arith.constant 0 : i32
    %2 = arith.cmpi ne, %1, %c0_i32_0 : i32
    scf.if %2 {
      %cst_17 = arith.constant 0.000000e+00 : f32
      %38 = vector.broadcast %cst_17 : f32 to vector<1x8x128xf32>
      %c0_18 = arith.constant 0 : index
      %c0_19 = arith.constant 0 : index
      %c0_20 = arith.constant 0 : index
      %39 = vector.load %arg4[%c0_18, %c0_19, %c0_20] : memref<1x8x128xf32, #tpu.memory_space<vmem>>, vector<1x8x128xf32>
      tpu.vector_store %arg4[%c0_18, %c0_19, %c0_20], %38 {strides = array<i32>} : memref<1x8x128xf32, #tpu.memory_space<vmem>>, vector<1x8x128xf32>,
    } else {
    }
    %c0 = arith.constant 0 : index
    %c0_1 = arith.constant 0 : index
    %3 = vector.load %arg2[%c0, %c0_1] : memref<32x128xbf16, #tpu.memory_space<vmem>>, vector<32x128xbf16>
    %4 = arith.extf %3 : vector<32x128xbf16> to vector<32x128xf32>
    %c0_2 = arith.constant 0 : index
    %c0_3 = arith.constant 0 : index
    %5 = vector.load %arg3[%c0_2, %c0_3] : memref<32x128xi8, #tpu.memory_space<vmem>>, vector<32x128xi8>
    %6 = arith.sitofp %5 : vector<32x128xi8> to vector<32x128xf32>
    %7 = arith.mulf %4, %6 : vector<32x128xf32>
    %cst = arith.constant dense<0.000000e+00> : vector<32xf32>
    %8 = vector.multi_reduction <add>, %7, %cst [1] : vector<32x128xf32> to vector<32xf32>
    %9 = vector.shape_cast %8 : vector<32xf32> to vector<32x1xf32>
    %10 = arith.addf %4, %6 : vector<32x128xf32>
    %cst_4 = arith.constant dense<0.000000e+00> : vector<32xf32>
    %11 = vector.multi_reduction <add>, %10, %cst_4 [1] : vector<32x128xf32> to vector<32xf32>
    %12 = vector.shape_cast %11 : vector<32xf32> to vector<32x1xf32>
    %cst_5 = arith.constant 1.000000e+00 : f32
    %13 = vector.broadcast %cst_5 : f32 to vector<32x1xf32>
    %14 = arith.addf %9, %13 : vector<32x1xf32>
    %cst_6 = arith.constant 2.000000e+00 : f32
    %15 = vector.broadcast %cst_6 : f32 to vector<32x1xf32>
    %16 = arith.mulf %15, %14 : vector<32x1xf32>
    %cst_7 = arith.constant 1.000000e+00 : f32
    %17 = vector.broadcast %cst_7 : f32 to vector<32x1xf32>
    %18 = arith.addf %12, %17 : vector<32x1xf32>
    %19 = arith.divf %16, %18 : vector<32x1xf32>
    %c1_i32 = arith.constant 1 : i32
    %20 = arith.muli %arg0, %c1_i32 : i32
    %21 = arith.addi %20, %arg1 : i32
    %c32_i32 = arith.constant 32 : i32
    %22 = arith.muli %21, %c32_i32 : i32
    %23 = tpu.iota {dimensions = array<i32: 0>} : vector<32x1xi32>
    %24 = vector.broadcast %22 : i32 to vector<32x1xi32>
    %25 = arith.addi %24, %23 : vector<32x1xi32>
    %c32_i32_8 = arith.constant 32 : i32
    %26 = vector.broadcast %c32_i32_8 : i32 to vector<32x1xi32>
    %27 = arith.cmpi slt, %25, %26 : vector<32x1xi32>
    %cst_9 = arith.constant 0.000000e+00 : f32
    %28 = vector.broadcast %cst_9 : f32 to vector<32x1xf32>
    %29 = arith.select %27, %19, %28 : vector<32x1xi1>, vector<32x1xf32>
    %c0_10 = arith.constant 0 : index
    %c0_11 = arith.constant 0 : index
    %c0_12 = arith.constant 0 : index
    %30 = vector.load %arg4[%c0_10, %c0_11, %c0_12] : memref<1x8x128xf32, #tpu.memory_space<vmem>>, vector<1x8x128xf32>
    %31 = vector.shape_cast %29 : vector<32x1xf32> to vector<1x32x1xf32>
    %cst_13 = arith.constant dense<0.000000e+00> : vector<1xf32>
    %32 = vector.multi_reduction <add>, %31, %cst_13 [1, 2] : vector<1x32x1xf32> to vector<1xf32>
    %33 = vector.shape_cast %32 : vector<1xf32> to vector<1x1x1xf32>
    %34 = vector.extract %33[0, 0, 0] : f32 from vector<1x1x1xf32>
    %35 = vector.broadcast %34 : f32 to vector<1x8x128xf32>
    %36 = arith.addf %30, %35 : vector<1x8x128xf32>
    %c0_14 = arith.constant 0 : index
    %c0_15 = arith.constant 0 : index
    %c0_16 = arith.constant 0 : index
    %37 = vector.load %arg4[%c0_14, %c0_15, %c0_16] : memref<1x8x128xf32, #tpu.memory_space<vmem>>, vector<1x8x128xf32>
    tpu.vector_store %arg4[%c0_14, %c0_15, %c0_16], %36 {strides = array<i32>} : memref<1x8x128xf32, #tpu.memory_space<vmem>>, vector<1x8x128xf32>,
    return
  }
  func.func @transform_0(%arg0: i32, %arg1: i32) -> (i32, i32) {
    %c1_i32 = arith.constant 1 : i32
    %0 = arith.muli %arg0, %c1_i32 : i32
    %1 = arith.addi %0, %arg1 : i32
    %c0_i32 = arith.constant 0 : i32
    %2 = arith.minsi %1, %c0_i32 : i32
    %c0_i32_0 = arith.constant 0 : i32
    %c0_i32_1 = arith.constant 0 : i32
    return %2, %c0_i32_0 : i32, i32
  }
  func.func @transform_1(%arg0: i32, %arg1: i32) -> (i32, i32) {
    %c1_i32 = arith.constant 1 : i32
    %0 = arith.muli %arg0, %c1_i32 : i32
    %1 = arith.addi %0, %arg1 : i32
    %c0_i32 = arith.constant 0 : i32
    %2 = arith.minsi %1, %c0_i32 : i32
    %c0_i32_0 = arith.constant 0 : i32
    %c0_i32_1 = arith.constant 0 : i32
    return %2, %c0_i32_0 : i32, i32
  }
  func.func @transform_2(%arg0: i32, %arg1: i32) -> (i32, i32, i32) {
    %c0_i32 = arith.constant 0 : i32
    %c0_i32_0 = arith.constant 0 : i32
    %c0_i32_1 = arith.constant 0 : i32
    return %arg0, %c0_i32, %c0_i32_0 : i32, i32, i32
  }
}

</mosaic_0001>

<llo_original>
// kernel: tpu_custom_call.1
$region0: #{tpu_custom_call.1}
  #allocation0 [shape = 'u32[]', space=smem, size = 0x4, offset = 0x4, fixed_abs, tag = 'smem constant byte address 0x4 - core index']
  #allocation1 [shape = 'u32[144,128]{1,0:T(1,128)}', space=vmem, size = 0x12000, scoped, tag = 'internal scratch']
  %s0 = inlined_call_operand.hbm [shape: bf16[32,128], index: 0, kind: input, shape index: {}]
  %s1 = inlined_call_operand.hbm [shape: s8[32,128], index: 1, kind: input, shape index: {}]
  %s2 = inlined_call_operand.hbm [shape: f32[1,8,128], index: 2, kind: output, shape index: {}]
  %s3 = sld [smem:[#allocation0]]
  $region30: #{tpu_custom_call.1} parent=0
    _
  %s5 = ssub.s32 1, %s3
  %s6 = scalar_select 0, %s5, %s3
  $region1: #{tpu_custom_call.1} parent=0
    #allocation2 [shape = 'u8[8192]{0}', space=vmem, size = 0x2000, scoped, tag = 'input window, operand 0, single buffered']
    #allocation3 [shape = 's32[1]{0}', space=sflag, size = 0x4, scoped, tag = 'scoped memory for tpu_custom_call.1']
    #allocation4 [shape = 's32[1]{0}', space=sflag, size = 0x4, scoped, tag = 'scoped memory for tpu_custom_call.1']
    #allocation5 [shape = 'u8[4096]{0}', space=vmem, size = 0x1000, scoped, tag = 'input window, operand 1, single buffered']
    #allocation6 [shape = 's32[1]{0}', space=sflag, size = 0x4, scoped, tag = 'scoped memory for tpu_custom_call.1']
    #allocation7 [shape = 'u8[4096]{0}', space=vmem, size = 0x1000, scoped, tag = 'output window, operand 0, single buffered']
    %7 = vsyncpa [#allocation3], 0
    %8 = vsyncpa [#allocation6], 0
    %9 = vsyncpa [#allocation4], 0
    // Predicated region
    $region2: #{tpu_custom_call.1} parent=1 // pred_check
      _
    $region3: #{tpu_custom_call.1} parent=1 // pred_check_branch
      %11 = sbr.rel (0) target = $region5
    $region4: #{tpu_custom_call.1} parent=1 // pred_region
      %s12 = sadd.s32 0, 0
      %p13 = scmp.lt.s32.totalorder %s12, 0
      %s14 = scalar_select %p13, %s12, 0
      %s15 = smul.u32 4, %s14
      %s17 = ssub.s32 256, 256
      %18 = vsyncadd [#allocation3], %s17
      %s19 = smul.addr %s15, 64
      %s20 = scalar_lea.hbm %s0, %s19
      %s21 = sshll.u32 [#allocation2], 4
      %s22 = int_to_ptr.vmem [resolvable:$true] %s21
      %27 = dma.hbm_to_vmem [thread:$0]  %s20, 256, %s22, [#allocation3], 64, 64, 4
    $region5: #{tpu_custom_call.1} parent=1 // pred_fallthru
      _
    // Predicated region
    $region6: #{tpu_custom_call.1} parent=1 // pred_check
      _
    $region7: #{tpu_custom_call.1} parent=1 // pred_check_branch
      %29 = sbr.rel (0) target = $region9
    $region8: #{tpu_custom_call.1} parent=1 // pred_region
      %s30 = sadd.s32 0, 0
      %p31 = scmp.lt.s32.totalorder %s30, 0
      %s32 = scalar_select %p31, %s30, 0
      %s34 = ssub.s32 128, 128
      %35 = vsyncadd [#allocation6], %s34
      %s36 = smul.addr %s32, 128
      %s37 = scalar_lea.hbm %s1, %s36
      %s39 = sshll.u32 [#allocation5], 4
      %s40 = int_to_ptr.vmem [resolvable:$true] %s39
      %42 = dma.hbm_to_vmem [thread:$0]  %s37, 128, %s40, [#allocation6]
    $region9: #{tpu_custom_call.1} parent=1 // pred_fallthru
      _
    // Predicated region
    $region10: #{tpu_custom_call.1} parent=1 // pred_check
      _
    $region11: #{tpu_custom_call.1} parent=1 // pred_check_branch
      %44 = sbr.rel (0) target = $region13
    $region12: #{tpu_custom_call.1} parent=1 // pred_region
      %45 = dma.done [#allocation3], 256
    $region13: #{tpu_custom_call.1} parent=1 // pred_fallthru
      _
    // Predicated region
    $region14: #{tpu_custom_call.1} parent=1 // pred_check
      _
    $region15: #{tpu_custom_call.1} parent=1 // pred_check_branch
      %47 = sbr.rel (0) target = $region17
    $region16: #{tpu_custom_call.1} parent=1 // pred_region
      %48 = dma.done [#allocation6], 128
    $region17: #{tpu_custom_call.1} parent=1 // pred_fallthru
      _
    %s49 = sadd.s32 0, 0
    %p50 = scmp.lt.s32.totalorder %s49, 0
    %s51 = scalar_select %p50, %s49, 0
    %s52 = smul.u32 4, %s51
    %s53 = sadd.s32 0, 0
    %p54 = scmp.lt.s32.totalorder %s53, 0
    %s55 = scalar_select %p54, %s53, 0
    %p56 = scmp.eq.s32.totalorder 0, 0
    // Predicated region
    $region18: #{tpu_custom_call.1} parent=1 // pred_check
      %p57 = pneg %p56
    $region19: #{tpu_custom_call.1} parent=1 // pred_check_branch
      %59 = sbr.rel (%p57) target = $region21
    $region20: #{tpu_custom_call.1} parent=1 // pred_region
      %60 = vst [vmem:[#allocation7] sm:$0xff] 0.0
    $region21: #{tpu_custom_call.1} parent=1 // pred_fallthru
      _
    %v61 = vld [vmem:[#allocation2] sm:$0xf]
    %v62 = vld [vmem:[#allocation2 + $0x4] sm:$0xf]
    %v63 = vld [vmem:[#allocation2 + $0x8] sm:$0xf]
    %v64 = vld [vmem:[#allocation2 + $0xc] sm:$0xf]
    %v65 = vunpack.c.l.bf16 %v61
    %v66 = vunpack.c.l.bf16 %v62
    %v67 = vunpack.c.l.bf16 %v63
    %v68 = vunpack.c.l.bf16 %v64
    %v69 = vld [vmem:[#allocation5] sm:$0xff]
    %v70 = vunpack.c.0.s8 %v69
    %v71 = vunpack.c.1.s8 %v69
    %v72 = vunpack.c.2.s8 %v69
    %v73 = vunpack.c.3.s8 %v69
    %v74 = vcvt.s32.f32 %v70
    %v75 = vcvt.s32.f32 %v71
    %v76 = vcvt.s32.f32 %v72
    %v77 = vcvt.s32.f32 %v73
    %v78 = vmul.f32 %v65, %v74
    %v79 = vmul.f32 %v66, %v75
    %v80 = vmul.f32 %v67, %v76
    %v81 = vmul.f32 %v68, %v77
    %82 = vadd.xlane.f32.xlu0 %v78
    %v83 = vpop.xlane.xlu0 %82
    %84 = vadd.xlane.f32.xlu0 %v79
    %v85 = vpop.xlane.xlu0 %84
    %86 = vadd.xlane.f32.xlu0 %v80
    %v87 = vpop.xlane.xlu0 %86
    %88 = vadd.xlane.f32.xlu0 %v81
    %v89 = vpop.xlane.xlu0 %88
    %v90 = vadd.f32 %v65, %v74
    %v91 = vadd.f32 %v66, %v75
    %v92 = vadd.f32 %v67, %v76
    %v93 = vadd.f32 %v68, %v77
    %94 = vadd.xlane.f32.xlu0 %v90
    %v95 = vpop.xlane.xlu0 %94
    %96 = vadd.xlane.f32.xlu0 %v91
    %v97 = vpop.xlane.xlu0 %96
    %98 = vadd.xlane.f32.xlu0 %v92
    %v99 = vpop.xlane.xlu0 %98
    %100 = vadd.xlane.f32.xlu0 %v93
    %v101 = vpop.xlane.xlu0 %100
    %v102 = vadd.f32 %v83, 1.0
    %v103 = vadd.f32 %v85, 1.0
    %v104 = vadd.f32 %v87, 1.0
    %v105 = vadd.f32 %v89, 1.0
    %v106 = vmul.f32 %v102, 2.0
    %v107 = vmul.f32 %v103, 2.0
    %v108 = vmul.f32 %v104, 2.0
    %v109 = vmul.f32 %v105, 2.0
    %v110 = vadd.f32 %v95, 1.0
    %v111 = vadd.f32 %v97, 1.0
    %v112 = vadd.f32 %v99, 1.0
    %v113 = vadd.f32 %v101, 1.0
    %v114 = vrcp.pop %v110
    %v115 = vmul.f32 %v106, %v114
    %v116 = vrcp.pop %v111
    %v117 = vmul.f32 %v107, %v116
    %v118 = vrcp.pop %v112
    %v119 = vmul.f32 %v108, %v118
    %v120 = vrcp.pop %v113
    %v121 = vmul.f32 %v109, %v120
    %s122 = sadd.s32 0, 0
    %s123 = smul.u32 %s122, 32
    %v124 = vlaneseq
    %v125 = vshrl.u32 %v124, 7
    %v126 = vadd.s32 %v125, 8
    %v127 = vadd.s32 %v125, 16
    %v128 = vadd.s32 %v125, 24
    %v129 = vstv %s123
    %v130 = vadd.s32 %v129, %v125
    %v131 = vadd.s32 %v129, %v126
    %v132 = vadd.s32 %v129, %v127
    %v133 = vadd.s32 %v129, %v128
    %vm134 = vcmp.lt.s32.totalorder %v130, 32
    %vm135 = vcmp.lt.s32.totalorder %v131, 32
    %vm136 = vcmp.lt.s32.totalorder %v132, 32
    %vm137 = vcmp.lt.s32.totalorder %v133, 32
    %v138 = vsel %vm134, %v115, 0.0
    %v139 = vsel %vm135, %v117, 0.0
    %v140 = vsel %vm136, %v119, 0.0
    %v141 = vsel %vm137, %v121, 0.0
    %v142 = vld [vmem:[#allocation7] sm:$0xff]
    %vm143 = vcmask 7168
    %v144 = vsel %vm143, %v138, 0.0
    %v145 = vsel %vm143, %v139, 0.0
    %v146 = vadd.f32 %v144, %v145
    %v147 = vsel %vm143, %v140, 0.0
    %v148 = vadd.f32 %v146, %v147
    %v149 = vsel %vm143, %v141, 0.0
    %v150 = vadd.f32 %v148, %v149
    %151 = vadd.xlane.f32.xlu0 %v150
    %v152 = vpop.xlane.xlu0 %151
    %v153 = vrot.slane %v152, 4
    %v154 = vadd.f32 %v152, %v153
    %v155 = vrot.slane %v154, 2
    %v156 = vadd.f32 %v154, %v155
    %v157 = vrot.slane %v156, 1
    %v158 = vadd.f32 %v156, %v157
    %s159 = vtos %v158
    %v160 = vstv %s159
    %v161 = vadd.f32 %v142, %v160
    %162 = vst [vmem:[#allocation7] sm:$0xff] %v161
    // Predicated region
    $region22: #{tpu_custom_call.1} parent=1 // pred_check
      _
    $region23: #{tpu_custom_call.1} parent=1 // pred_check_branch
      %164 = sbr.rel (0) target = $region25
    $region24: #{tpu_custom_call.1} parent=1 // pred_region
      %s166 = ssub.s32 128, 128
      %167 = vsyncadd [#allocation4], %s166
      %s169 = sshll.u32 [#allocation7], 4
      %s170 = int_to_ptr.vmem [resolvable:$true] %s169
      %172 = dma.vmem_to_hbm [thread:$0]  %s170, 128, %s2, [#allocation4]
    $region25: #{tpu_custom_call.1} parent=1 // pred_fallthru
      _
    // Predicated region
    $region26: #{tpu_custom_call.1} parent=1 // pred_check
      _
    $region27: #{tpu_custom_call.1} parent=1 // pred_check_branch
      %174 = sbr.rel (0) target = $region29
    $region28: #{tpu_custom_call.1} parent=1 // pred_region
      %175 = dma.done [#allocation4], 128
    $region29: #{tpu_custom_call.1} parent=1 // pred_fallthru
      _
    %176 = vsyncpa [#allocation3], 1
    %177 = vsyncpa [#allocation6], 1
    %178 = vsyncpa [#allocation4], 1

</llo_original>
